<compile_context>
chip_gen: v5e
topology: v5e:2x2
jax: 0.10.0
libtpu: 0.0.40
codegen_flags: <defaults>
</compile_context>

<pallas_src>
import functools

import jax
import jax.numpy as jnp
from jax.experimental import pallas as pl
from jax.experimental.pallas import tpu as pltpu

LANE = 128


def _an_loss_kernel(x_ref, t_ref, out_ref, acc_ref, *,
                    nblocks, inner, acc_rows, valid_in_last, eps, eps_is_zero):
    """Accumulate BCE-with-logits over one (eff_rows, 128) tile."""
    s = pl.program_id(0)  # parallel split (megacore axis)
    i = pl.program_id(1)  # reduction step inside the split

    @pl.when(i == 0)
    def _init():
        acc_ref[...] = jnp.zeros_like(acc_ref)

    x = x_ref[...].astype(jnp.float32)
    t = t_ref[...].astype(jnp.float32)
    br, lane = x.shape
    groups = br // acc_rows

    if eps_is_zero:
        # epsilon == 0 with multi-hot {0,1} targets: y == target, no select.
        y = t
    else:
        y = jnp.where(t == 1.0, jnp.float32(1.0 - eps), jnp.float32(eps))

    # Numerically stable BCEWithLogitsLoss (reduction='none'):
    #   loss = max(x, 0) - x*y + log1p(exp(-|x|))
    # exp(-|x|) <= 1, so no overflow even for garbage edge data (which is
    # masked out by the select in the last-block path below).
    loss = jnp.maximum(x, 0.0) - x * y + jnp.log1p(jnp.exp(-jnp.abs(x)))

    blk = s * inner + i  # logical block id (>= nblocks for phantom steps)

    @pl.when(blk < nblocks - 1)
    def _interior():
        # Fast path: no iota, no compare, no select — pure VALU adds into the
        # small (acc_rows, 128) accumulator.
        acc_ref[...] = acc_ref[...] + loss.reshape(groups, acc_rows, lane).sum(axis=0)

    @pl.when(blk >= nblocks - 1)
    def _last_or_phantom():
        # Slow path: runs once per split at most.  Mask uses block-local
        # indices (max value eff_rows*128 << 2^31) against a static bound;
        # phantom blocks (clamped index_map re-reads of the last real block)
        # are fully masked via is_real.
        row = jax.lax.broadcasted_iota(jnp.int32, (br, lane), 0)
        col = jax.lax.broadcasted_iota(jnp.int32, (br, lane), 1)
        lidx = row * lane + col
        is_real = blk == nblocks - 1
        valid = jnp.logical_and(is_real, lidx < valid_in_last)
        masked = jnp.where(valid, loss, 0.0)  # select also kills NaN/Inf garbage
        acc_ref[...] = acc_ref[...] + masked.reshape(groups, acc_rows, lane).sum(axis=0)

    @pl.when(i == inner - 1)
    def _finalize():
        # One small sublane reduction per split -> lane-dense (1, 128) block.
        out_ref[...] = jnp.sum(acc_ref[...], axis=0, keepdims=True)


@functools.partial(
    jax.jit,
    static_argnames=("reduction", "epsilon", "block_rows", "binary_targets"))
def an_loss(x, target, *, reduction="mean", epsilon=0.0, block_rows=4096,
            binary_targets=True):
    assert x.shape == target.shape
    assert reduction in ("sum", "mean")
    assert 0.0 <= epsilon <= 1.0
    assert block_rows % 8 == 0
    numel = x.size

    # Native dtypes throughout the wrapper — casting happens inside the kernel.
    xf = x.reshape(-1)
    tf = target.reshape(-1)

    pad = (-numel) % LANE
    if pad:
        # Ragged path only (<128-element tail).  The 128-aligned common case
        # is a zero-copy reshape; partial *blocks* are handled by Pallas edge
        # clipping + the in-kernel last-block mask, not by padding.
        xf = jnp.pad(xf, (0, pad))
        tf = jnp.pad(tf, (0, pad))

    rows = xf.shape[0] // LANE
    x2 = xf.reshape(rows, LANE)
    t2 = tf.reshape(rows, LANE)

    # Tile size: as large as requested; full-array block for small inputs.
    eff_rows = rows if rows <= block_rows else block_rows
    nblocks = pl.cdiv(rows, eff_rows)

    # Leading "parallel" axis lets v7x shard the reduction across both
    # TensorCores; it is a no-op (sequential) on single-TC chips.
    num_splits = 2 if nblocks >= 2 else 1
    inner = pl.cdiv(nblocks, num_splits)

    # Small accumulator: 32 rows when possible, still a multiple of the f32
    # sublane tile; degenerate tiny inputs fall back to the full block.
    if eff_rows % 32 == 0:
        acc_rows = 32
    elif eff_rows % 8 == 0:
        acc_rows = 8
    else:
        acc_rows = eff_rows

    block_elems = eff_rows * LANE
    # Static count of valid elements inside the last logical block (covers
    # both the ragged padded tail and Pallas edge-block clipping garbage).
    valid_in_last = numel - (nblocks - 1) * block_elems

    def in_map(sp, it):
        blk = sp * inner + it
        if num_splits * inner != nblocks:
            # Clamp phantom trailing block indices so no DMA goes out of
            # bounds; their contribution is zeroed in-kernel (is_real mask).
            blk = jnp.minimum(blk, nblocks - 1)
        return (blk, 0)

    eps_is_zero = bool(binary_targets) and float(epsilon) == 0.0

    out = pl.pallas_call(
        functools.partial(
            _an_loss_kernel, nblocks=nblocks, inner=inner, acc_rows=acc_rows,
            valid_in_last=valid_in_last, eps=float(epsilon),
            eps_is_zero=eps_is_zero),
        out_shape=jax.ShapeDtypeStruct((1, num_splits * LANE), jnp.float32),
        grid_spec=pltpu.PrefetchScalarGridSpec(
            num_scalar_prefetch=0,
            grid=(num_splits, inner),
            in_specs=[
                pl.BlockSpec((eff_rows, LANE), in_map),
                pl.BlockSpec((eff_rows, LANE), in_map),
            ],
            out_specs=pl.BlockSpec((1, LANE), lambda sp, it: (0, sp)),
            scratch_shapes=[pltpu.VMEM((acc_rows, LANE), jnp.float32)],
        ),
        compiler_params=pltpu.CompilerParams(
            dimension_semantics=("parallel", "arbitrary"),
            # Explicit limit: well above our ~9 MiB use, raises v5e's 16 MiB
            # scoped default, stays within every generation's physical VMEM.
            vmem_limit_bytes=32 * 1024 * 1024,
        ),
    )(x2, t2)

    # Tiny final reduce (128 or 256 lanes) in plain JAX.
    loss = jnp.sum(out)
    if reduction == "mean":
        loss = loss / jnp.float32(numel)
    return loss


def _an_loss_ref(x, target, reduction="mean", epsilon=0.0):
    """Pure-JAX reference mirroring the PyTorch ANLoss module literally."""
    x = x.astype(jnp.float32)
    t = target.astype(jnp.float32)
    y = jnp.float32(1.0 - epsilon)

    def bce(logits, yy):
        return (jnp.maximum(logits, 0.0) - logits * yy
                + jnp.log1p(jnp.exp(-jnp.abs(logits))))

    pos = bce(x, y)       # target == 1: BCE(x, 1 - eps)
    neg = bce(-x, y)      # target != 1: BCE(-x, 1 - eps)
    per = jnp.where(t == 1.0, pos, neg)
    s = jnp.sum(per)
    if reduction == "mean":
        s = s / jnp.float32(x.size)
    return s


if __name__ == "__main__":
    key = jax.random.PRNGKey(0)
    kx, kt = jax.random.split(key)

    # Small multi-label logits / binary targets, NCHW convention.
    shape = (2, 4, 16, 16)
    x = jax.random.normal(kx, shape, dtype=jnp.float32)
    target = jax.random.bernoulli(kt, p=0.3, shape=shape).astype(jnp.float32)

    out_mean = jax.block_until_ready(an_loss(x, target, reduction="mean"))
    out_sum = jax.block_until_ready(an_loss(x, target, reduction="sum"))
    assert jnp.allclose(out_mean, _an_loss_ref(x, target, "mean", 0.0),
                        rtol=1e-4, atol=1e-5)
    assert jnp.allclose(out_sum, _an_loss_ref(x, target, "sum", 0.0),
                        rtol=1e-4, atol=1e-3)

    # Label smoothing + ragged size (not a multiple of 128) -> ragged padding
    # + last-block masking, general (non-binary-fast-path) y formula.
    shape2 = (2, 3, 15, 15)
    kx2, kt2 = jax.random.split(jax.random.PRNGKey(1))
    x2 = jax.random.normal(kx2, shape2, dtype=jnp.float32)
    t2 = jax.random.bernoulli(kt2, p=0.25, shape=shape2).astype(jnp.float32)
    out2 = jax.block_until_ready(an_loss(x2, t2, reduction="mean", epsilon=0.1))
    assert jnp.allclose(out2, _an_loss_ref(x2, t2, "mean", 0.1),
                        rtol=1e-4, atol=1e-5)

    # Native bf16 inputs: no wrapper casts, f32 math inside the kernel.
    xb = x.astype(jnp.bfloat16)
    tb = target.astype(jnp.bfloat16)
    out_b = jax.block_until_ready(an_loss(xb, tb, reduction="mean"))
    assert jnp.allclose(out_b, _an_loss_ref(xb, tb, "mean", 0.0),
                        rtol=1e-3, atol=1e-3)

    # Multi-block grid with a small block_rows override: exercises the
    # interior fast path, the megacore split, a clipped (partial) last block,
    # and a phantom trailing grid step (nblocks=3 -> splits=2, inner=2).
    shape3 = (2, 4, 41, 128)
    kx3, kt3 = jax.random.split(jax.random.PRNGKey(2))
    x3 = jax.random.normal(kx3, shape3, dtype=jnp.float32)
    t3 = jax.random.bernoulli(kt3, p=0.2, shape=shape3).astype(jnp.float32)
    out3 = jax.block_until_ready(an_loss(x3, t3, reduction="mean",
                                         block_rows=128))
    assert jnp.allclose(out3, _an_loss_ref(x3, t3, "mean", 0.0),
                        rtol=1e-4, atol=1e-5)
    out3s = jax.block_until_ready(an_loss(x3, t3, reduction="mean",
                                          epsilon=0.05, block_rows=128))
    assert jnp.allclose(out3s, _an_loss_ref(x3, t3, "mean", 0.05),
                        rtol=1e-4, atol=1e-5)

    print("KERNEL_OK")
</pallas_src>

<mosaic_0001>
module attributes {stable_mosaic.version = 11 : i64} {
  func.func @_an_loss_kernel(%arg0: i32, %arg1: i32, %arg2: memref<16x128xf32, #tpu.memory_space<vmem>>, %arg3: memref<16x128xf32, #tpu.memory_space<vmem>>, %arg4: memref<1x128xf32, #tpu.memory_space<vmem>>, %arg5: memref<8x128xf32, #tpu.memory_space<vmem>>) attributes {dimension_semantics = [#tpu.dimension_semantics<parallel>, #tpu.dimension_semantics<arbitrary>], iteration_bounds = array<i64: 1, 1>, scalar_prefetch = 0 : i64, scratch_operands = 1 : i64, tpu.core_type = #tpu.core_type<tc>, window_params = [{transform_indices = @transform_0, window_bounds = array<i64: 16, 128>}, {transform_indices = @transform_1, window_bounds = array<i64: 16, 128>}, {transform_indices = @transform_2, window_bounds = array<i64: 1, 128>}]} {
    %c0_i32 = arith.constant 0 : i32
    %0 = arith.cmpi eq, %arg1, %c0_i32 : i32
    %1 = arith.extui %0 : i1 to i32
    %c0_i32_0 = arith.constant 0 : i32
    %2 = arith.cmpi ne, %1, %c0_i32_0 : i32
    scf.if %2 {
      %cst_11 = arith.constant 0.000000e+00 : f32
      %26 = vector.broadcast %cst_11 : f32 to vector<8x128xf32>
      %c0_12 = arith.constant 0 : index
      %c0_13 = arith.constant 0 : index
      %27 = vector.load %arg5[%c0_12, %c0_13] : memref<8x128xf32, #tpu.memory_space<vmem>>, vector<8x128xf32>
      tpu.vector_store %arg5[%c0_12, %c0_13], %26 {strides = array<i32>} : memref<8x128xf32, #tpu.memory_space<vmem>>, vector<8x128xf32>,
    } else {
    }
    %c0 = arith.constant 0 : index
    %c0_1 = arith.constant 0 : index
    %3 = vector.load %arg2[%c0, %c0_1] : memref<16x128xf32, #tpu.memory_space<vmem>>, vector<16x128xf32>
    %c0_2 = arith.constant 0 : index
    %c0_3 = arith.constant 0 : index
    %4 = vector.load %arg3[%c0_2, %c0_3] : memref<16x128xf32, #tpu.memory_space<vmem>>, vector<16x128xf32>
    %cst = arith.constant 0.000000e+00 : f32
    %5 = vector.broadcast %cst : f32 to vector<16x128xf32>
    %6 = arith.maximumf %3, %5 : vector<16x128xf32>
    %7 = arith.mulf %3, %4 : vector<16x128xf32>
    %8 = arith.subf %6, %7 : vector<16x128xf32>
    %9 = math.absf %3 : vector<16x128xf32>
    %cst_4 = arith.constant 0.000000e+00 : f32
    %10 = vector.broadcast %cst_4 : f32 to vector<16x128xf32>
    %11 = arith.subf %10, %9 : vector<16x128xf32>
    %12 = math.exp %11 : vector<16x128xf32>
    %13 = math.log1p %12 : vector<16x128xf32>
    %14 = arith.addf %8, %13 : vector<16x128xf32>
    %c1_i32 = arith.constant 1 : i32
    %15 = arith.muli %arg0, %c1_i32 : i32
    %16 = arith.addi %15, %arg1 : i32
    %c0_i32_5 = arith.constant 0 : i32
    %17 = arith.cmpi slt, %16, %c0_i32_5 : i32
    %18 = arith.extui %17 : i1 to i32
    %c0_i32_6 = arith.constant 0 : i32
    %19 = arith.cmpi ne, %18, %c0_i32_6 : i32
    scf.if %19 {
      %c0_11 = arith.constant 0 : index
      %c0_12 = arith.constant 0 : index
      %26 = vector.load %arg5[%c0_11, %c0_12] : memref<8x128xf32, #tpu.memory_space<vmem>>, vector<8x128xf32>
      %27 = vector.shape_cast %14 : vector<16x128xf32> to vector<2x8x128xf32>
      %cst_13 = arith.constant dense<0.000000e+00> : vector<8x128xf32>
      %28 = vector.multi_reduction <add>, %27, %cst_13 [0] : vector<2x8x128xf32> to vector<8x128xf32>
      %29 = arith.addf %26, %28 : vector<8x128xf32>
      %c0_14 = arith.constant 0 : index
      %c0_15 = arith.constant 0 : index
      %30 = vector.load %arg5[%c0_14, %c0_15] : memref<8x128xf32, #tpu.memory_space<vmem>>, vector<8x128xf32>
      tpu.vector_store %arg5[%c0_14, %c0_15], %29 {strides = array<i32>} : memref<8x128xf32, #tpu.memory_space<vmem>>, vector<8x128xf32>,
    } else {
    }
    %c0_i32_7 = arith.constant 0 : i32
    %20 = arith.cmpi sge, %16, %c0_i32_7 : i32
    %21 = arith.extui %20 : i1 to i32
    %c0_i32_8 = arith.constant 0 : i32
    %22 = arith.cmpi ne, %21, %c0_i32_8 : i32
    scf.if %22 {
      %26 = tpu.iota {dimensions = array<i32: 0>} : vector<16x128xi32>
      %27 = tpu.iota {dimensions = array<i32: 1>} : vector<16x128xi32>
      %c128_i32 = arith.constant 128 : i32
      %28 = vector.broadcast %c128_i32 : i32 to vector<16x128xi32>
      %29 = arith.muli %26, %28 : vector<16x128xi32>
      %30 = arith.addi %29, %27 : vector<16x128xi32>
      %c0_i32_11 = arith.constant 0 : i32
      %31 = arith.cmpi eq, %16, %c0_i32_11 : i32
      %c2048_i32 = arith.constant 2048 : i32
      %32 = vector.broadcast %c2048_i32 : i32 to vector<16x128xi32>
      %33 = arith.cmpi slt, %30, %32 : vector<16x128xi32>
      %34 = vector.broadcast %31 : i1 to vector<16x128xi1>
      %35 = arith.andi %34, %33 : vector<16x128xi1>
      %cst_12 = arith.constant 0.000000e+00 : f32
      %36 = vector.broadcast %cst_12 : f32 to vector<16x128xf32>
      %37 = arith.select %35, %14, %36 : vector<16x128xi1>, vector<16x128xf32>
      %c0_13 = arith.constant 0 : index
      %c0_14 = arith.constant 0 : index
      %38 = vector.load %arg5[%c0_13, %c0_14] : memref<8x128xf32, #tpu.memory_space<vmem>>, vector<8x128xf32>
      %39 = vector.shape_cast %37 : vector<16x128xf32> to vector<2x8x128xf32>
      %cst_15 = arith.constant dense<0.000000e+00> : vector<8x128xf32>
      %40 = vector.multi_reduction <add>, %39, %cst_15 [0] : vector<2x8x128xf32> to vector<8x128xf32>
      %41 = arith.addf %38, %40 : vector<8x128xf32>
      %c0_16 = arith.constant 0 : index
      %c0_17 = arith.constant 0 : index
      %42 = vector.load %arg5[%c0_16, %c0_17] : memref<8x128xf32, #tpu.memory_space<vmem>>, vector<8x128xf32>
      tpu.vector_store %arg5[%c0_16, %c0_17], %41 {strides = array<i32>} : memref<8x128xf32, #tpu.memory_space<vmem>>, vector<8x128xf32>,
    } else {
    }
    %c0_i32_9 = arith.constant 0 : i32
    %23 = arith.cmpi eq, %arg1, %c0_i32_9 : i32
    %24 = arith.extui %23 : i1 to i32
    %c0_i32_10 = arith.constant 0 : i32
    %25 = arith.cmpi ne, %24, %c0_i32_10 : i32
    scf.if %25 {
      %c0_11 = arith.constant 0 : index
      %c0_12 = arith.constant 0 : index
      %26 = vector.load %arg5[%c0_11, %c0_12] : memref<8x128xf32, #tpu.memory_space<vmem>>, vector<8x128xf32>
      %cst_13 = arith.constant dense<0.000000e+00> : vector<128xf32>
      %27 = vector.multi_reduction <add>, %26, %cst_13 [0] : vector<8x128xf32> to vector<128xf32>
      %28 = vector.shape_cast %27 : vector<128xf32> to vector<1x128xf32>
      %c0_14 = arith.constant 0 : index
      %c0_15 = arith.constant 0 : index
      %29 = vector.load %arg4[%c0_14, %c0_15] : memref<1x128xf32, #tpu.memory_space<vmem>>, vector<1x128xf32>
      tpu.vector_store %arg4[%c0_14, %c0_15], %28 {strides = array<i32>} : memref<1x128xf32, #tpu.memory_space<vmem>>, vector<1x128xf32>,
    } else {
    }
    return
  }
  func.func @transform_0(%arg0: i32, %arg1: i32) -> (i32, i32) {
    %c1_i32 = arith.constant 1 : i32
    %0 = arith.muli %arg0, %c1_i32 : i32
    %1 = arith.addi %0, %arg1 : i32
    %c0_i32 = arith.constant 0 : i32
    %c0_i32_0 = arith.constant 0 : i32
    return %1, %c0_i32 : i32, i32
  }
  func.func @transform_1(%arg0: i32, %arg1: i32) -> (i32, i32) {
    %c1_i32 = arith.constant 1 : i32
    %0 = arith.muli %arg0, %c1_i32 : i32
    %1 = arith.addi %0, %arg1 : i32
    %c0_i32 = arith.constant 0 : i32
    %c0_i32_0 = arith.constant 0 : i32
    return %1, %c0_i32 : i32, i32
  }
  func.func @transform_2(%arg0: i32, %arg1: i32) -> (i32, i32) {
    %c0_i32 = arith.constant 0 : i32
    %c0_i32_0 = arith.constant 0 : i32
    return %c0_i32, %arg0 : i32, i32
  }
}

</mosaic_0001>

<llo_original>
// kernel: an_loss.1
$region0: #{an_loss.1}
  #allocation0 [shape = 'u32[]', space=smem, size = 0x4, offset = 0x4, fixed_abs, tag = 'smem constant byte address 0x4 - core index']
  #allocation1 [shape = 'u32[72,128]{1,0:T(1,128)}', space=vmem, size = 0x9000, scoped, tag = 'internal scratch']
  #allocation2 [shape = 'f32[8,128]{1,0:T(8,128)}', space=vmem, size = 0x1000, scoped, tag = 'scratch operand']
  %s0 = inlined_call_operand.vmem [shape: f32[16,128], index: 0, kind: input, shape index: {}]
  %s1 = inlined_call_operand.vmem [shape: f32[16,128], index: 1, kind: input, shape index: {}]
  %s2 = inlined_call_operand.vmem [shape: f32[1,128], index: 2, kind: output, shape index: {}]
  %s3 = sld [smem:[#allocation0]]
  $region34: #{an_loss.1} parent=0
    _
  %s5 = ssub.s32 1, %s3
  %s6 = scalar_select 0, %s5, %s3
  // Predicated region
  $region2: #{an_loss.1} parent=0 // pred_check
    _
  $region3: #{an_loss.1} parent=0 // pred_check_branch
    %8 = sbr.rel (0) target = $region5
  $region4: #{an_loss.1} parent=0 // pred_region
    %s9 = sadd.s32 0, 0
    %s10 = smul.u32 2, %s9
    %p11 = scmp.lt.s32.totalorder %s10, 1
    %s12 = scalar_select %p11, %s10, 1
    %s13 = smul.addr %s12, 8
    %s14 = scalar_lea.vmem %s0, %s13
    %s15 = sadd.s32 0, 0
    %s16 = smul.u32 2, %s15
  $region5: #{an_loss.1} parent=0 // pred_fallthru
    _
  // Predicated region
  $region6: #{an_loss.1} parent=0 // pred_check
    _
  $region7: #{an_loss.1} parent=0 // pred_check_branch
    %18 = sbr.rel (0) target = $region9
  $region8: #{an_loss.1} parent=0 // pred_region
    %s19 = sadd.s32 0, 0
    %s20 = smul.u32 2, %s19
    %p21 = scmp.lt.s32.totalorder %s20, 1
    %s22 = scalar_select %p21, %s20, 1
    %s23 = smul.addr %s22, 8
    %s24 = scalar_lea.vmem %s1, %s23
    %s25 = sadd.s32 0, 0
    %s26 = smul.u32 2, %s25
  $region9: #{an_loss.1} parent=0 // pred_fallthru
    _
  %s27 = sadd.s32 0, 0
  %s28 = smul.u32 2, %s27
  %p29 = scmp.lt.s32.totalorder %s28, 1
  %s30 = scalar_select %p29, %s28, 1
  %s31 = smul.addr %s30, 8
  %s32 = scalar_lea.vmem %s0, %s31
  %s33 = sadd.s32 0, 0
  %s34 = smul.u32 2, %s33
  %p35 = scmp.lt.s32.totalorder %s34, 1
  %s36 = scalar_select %p35, %s34, 1
  %s37 = smul.addr %s36, 8
  %s38 = scalar_lea.vmem %s1, %s37
  %s39 = sadd.s32 0, 0
  %s40 = smul.u32 2, %s39
  %p41 = scmp.lt.s32.totalorder %s40, 1
  %s42 = scalar_select %p41, %s40, 1
  %s43 = smul.addr %s42, 8
  %s44 = scalar_lea.vmem %s0, %s43
  %s45 = sadd.s32 0, 0
  %s46 = smul.u32 2, %s45
  %s47 = sadd.s32 0, 0
  %s48 = smul.u32 2, %s47
  %p49 = scmp.lt.s32.totalorder %s48, 1
  %s50 = scalar_select %p49, %s48, 1
  %s51 = smul.addr %s50, 8
  %s52 = scalar_lea.vmem %s1, %s51
  %s53 = sadd.s32 0, 0
  %s54 = smul.u32 2, %s53
  %p55 = scmp.eq.s32.totalorder 0, 0
  // Predicated region
  $region10: #{an_loss.1} parent=0 // pred_check
    %p56 = pneg %p55
  $region11: #{an_loss.1} parent=0 // pred_check_branch
    %58 = sbr.rel (%p56) target = $region13
  $region12: #{an_loss.1} parent=0 // pred_region
    %59 = vst [vmem:[#allocation2] sm:$0xff] 0.0
  $region13: #{an_loss.1} parent=0 // pred_fallthru
    _
  %v60 = vld [vmem:[%s44] sm:$0xff]
  %v61 = vld [vmem:[%s44 + $0x8] sm:$0xff]
  %v62 = vld [vmem:[%s52] sm:$0xff]
  %v63 = vld [vmem:[%s52 + $0x8] sm:$0xff]
  %v64 = vmax.f32 %v60, 0.0
  %v65 = vmax.f32 %v61, 0.0
  %v66 = vmul.f32 %v60, %v62
  %v67 = vmul.f32 %v61, %v63
  %v68 = vsub.f32 %v64, %v66
  %v69 = vsub.f32 %v65, %v67
  %v70 = vand.u32 2147483647, %v60
  %v71 = vand.u32 2147483647, %v61
  %v72 = vsub.f32 0.0, %v70
  %v73 = vsub.f32 0.0, %v71
  %v74 = vmul.f32 %v72, 1.442695
  %v75 = vpow.pop %v74
  %v76 = vmul.f32 %v73, 1.442695
  %v77 = vpow.pop %v76
  %v78 = vadd.f32 %v75, 1.0
  %v79 = vlog2.pop %v78
  %v80 = vmul.f32 %v79, 0.6931472
  %v81 = vmul.f32 -0.5, %v75
  %v82 = vadd.f32 %v81, 1.0
  %v83 = vmul.f32 %v82, %v75
  %v84 = vand.u32 2147483647, %v75
  %vm85 = vcmp.lt.f32.partialorder %v84, 0.0004427343
  %v86 = vsel %vm85, %v83, %v80
  %v87 = vadd.f32 %v77, 1.0
  %v88 = vlog2.pop %v87
  %v89 = vmul.f32 %v88, 0.6931472
  %v90 = vmul.f32 -0.5, %v77
  %v91 = vadd.f32 %v90, 1.0
  %v92 = vmul.f32 %v91, %v77
  %v93 = vand.u32 2147483647, %v77
  %vm94 = vcmp.lt.f32.partialorder %v93, 0.0004427343
  %v95 = vsel %vm94, %v92, %v89
  %v96 = vadd.f32 %v68, %v86
  %v97 = vadd.f32 %v69, %v95
  %s98 = sadd.s32 0, 0
  %p99 = scmp.lt.s32.totalorder %s98, 0
  // Predicated region
  $region14: #{an_loss.1} parent=0 // pred_check
    %p100 = pneg %p99
  $region15: #{an_loss.1} parent=0 // pred_check_branch
    %102 = sbr.rel (%p100) target = $region17
  $region16: #{an_loss.1} parent=0 // pred_region
    %v103 = vld [vmem:[#allocation2] sm:$0xff]
    %v104 = vadd.f32 %v96, %v97
    %v105 = vadd.f32 %v103, %v104
    %106 = vst [vmem:[#allocation2] sm:$0xff] %v105
  $region17: #{an_loss.1} parent=0 // pred_fallthru
    _
  %p107 = scmp.ge.s32.totalorder %s98, 0
  // Predicated region
  $region18: #{an_loss.1} parent=0 // pred_check
    %p108 = pneg %p107
  $region19: #{an_loss.1} parent=0 // pred_check_branch
    %110 = sbr.rel (%p108) target = $region21
  $region20: #{an_loss.1} parent=0 // pred_region
    %v111 = vlaneseq
    %v112 = vshrl.u32 %v111, 7
    %v113 = vadd.s32 %v112, 8
    %v114 = vlaneseq
    %v115 = vand.u32 %v114, 127
    %v116 = vmul.u32 %v112, 128
    %v117 = vmul.u32 %v113, 128
    %v118 = vadd.s32 %v116, %v115
    %v119 = vadd.s32 %v117, %v115
    %p120 = scmp.eq.s32.totalorder %s98, 0
    %vm121 = vcmp.lt.s32.totalorder %v118, 2048
    %vm122 = vcmp.lt.s32.totalorder %v119, 2048
    %s123 = scalar_select %p120, 1, 0
    %v124 = vstv %s123
    %vm125 = vcmp.eq.s32.totalorder %v124, 1
    %vm126 = vmand %vm125, %vm121
    %vm127 = vmand %vm125, %vm122
    %v128 = vsel %vm126, %v96, 0.0
    %v129 = vsel %vm127, %v97, 0.0
    %v130 = vld [vmem:[#allocation2] sm:$0xff]
    %v131 = vadd.f32 %v128, %v129
    %v132 = vadd.f32 %v130, %v131
    %133 = vst [vmem:[#allocation2] sm:$0xff] %v132
  $region21: #{an_loss.1} parent=0 // pred_fallthru
    _
  // Predicated region
  $region22: #{an_loss.1} parent=0 // pred_check
    %p134 = pneg %p55
  $region23: #{an_loss.1} parent=0 // pred_check_branch
    %136 = sbr.rel (%p134) target = $region25
  $region24: #{an_loss.1} parent=0 // pred_region
    %v137 = vld [vmem:[#allocation2] sm:$0xff]
    %v138 = vrot.slane %v137, 4
    %v139 = vadd.f32 %v137, %v138
    %v140 = vrot.slane %v139, 2
    %v141 = vadd.f32 %v139, %v140
    %v142 = vrot.slane %v141, 1
    %v143 = vadd.f32 %v141, %v142
    %144 = vst [vmem:[%s2] sm:$0x1] %v143
  $region25: #{an_loss.1} parent=0 // pred_fallthru
    _
  // Predicated region
  $region26: #{an_loss.1} parent=0 // pred_check
    _
  $region27: #{an_loss.1} parent=0 // pred_check_branch
    %146 = sbr.rel (0) target = $region29
  $region28: #{an_loss.1} parent=0 // pred_region
    _
  $region29: #{an_loss.1} parent=0 // pred_fallthru
    _
  // Predicated region
  $region30: #{an_loss.1} parent=0 // pred_check
    _
  $region31: #{an_loss.1} parent=0 // pred_check_branch
    %148 = sbr.rel (0) target = $region33
  $region32: #{an_loss.1} parent=0 // pred_region
    _
  $region33: #{an_loss.1} parent=0 // pred_fallthru
    _

</llo_original>
